<compile_context>
chip_gen: v7x
topology: tpu7x:2x2x1
jax: 0.10.0
libtpu: 0.0.40
codegen_flags: <defaults>
</compile_context>

<pallas_src>
import math
import functools

import jax
import jax.numpy as jnp
from jax import lax
from jax.experimental import pallas as pl
from jax.experimental.pallas import tpu as pltpu


# x:(m,k) contracted with w:(n,k) on k -> (m,n)   ("NT" matmul, native W layout)
_NT_DIMS = (((1,), (1,)), ((), ()))


def _round_up(x: int, m: int) -> int:
    return (x + m - 1) // m * m


def _linear_kernel(*refs, has_bias: bool, out_is_acc: bool):
    """Grid = (M tiles, N tiles, K tiles); K innermost ('arbitrary') reduction.

    refs (in order):
      x_ref  : (tm, tk)  input tile                      (VMEM)
      w_ref  : (tn, tk)  weight tile, native (N,K) layout (VMEM)
      b_ref  : (1,  tn)  f32 bias tile        [only if has_bias]
      o_ref  : (tm, tn)  output tile (lane-dense, tn % 128 == 0)
      acc_ref: (tm, tn)  f32 scratch          [only if not out_is_acc]
    """
    x_ref, w_ref, *rest = refs
    pos = 0
    b_ref = None
    if has_bias:
        b_ref = rest[pos]
        pos += 1
    o_ref = rest[pos]
    acc_ref = o_ref if out_is_acc else rest[pos + 1]

    k = pl.program_id(2)

    @pl.when(k == 0)
    def _init():
        acc_ref[...] = jnp.zeros_like(acc_ref)

    acc_ref[...] += lax.dot_general(
        x_ref[...], w_ref[...], _NT_DIMS,
        preferred_element_type=jnp.float32)

    if has_bias or not out_is_acc:
        @pl.when(k == pl.num_programs(2) - 1)
        def _finalize():
            if out_is_acc:
                # o_ref is the f32 accumulator; just add the bias once.
                o_ref[...] += b_ref[...]
            else:
                y = acc_ref[...]
                if has_bias:
                    y = y + b_ref[...]
                o_ref[...] = y.astype(o_ref.dtype)


def _megacore_split(M: int, N: int, tm: int, tn: int):
    """Ensure >= 2 tiles across the parallel grid axes when the problem allows
    (v7x shards parallel grid dims across its 2 TensorCores)."""
    if (_round_up(M, tm) // tm) * (_round_up(N, tn) // tn) > 1:
        return tm, tn
    if tn > 128:
        half = _round_up(max(128, tn // 2), 128)
        if _round_up(N, half) // half >= 2:
            return tm, half
    if tm > 8:
        half = _round_up(max(8, tm // 2), 8)
        if _round_up(M, half) // half >= 2:
            return half, tn
    return tm, tn


def linear_forward(x, weight, bias=None, *,
                   tm=512, tn=512, tk=None, compute_dtype=None):
    """LinearLayer forward: y = x @ weight.T (+ bias).

    x      : (..., in_features)
    weight : (out_features, in_features)   -- native PyTorch layout, NOT transposed
    bias   : (out_features,) or None
    compute_dtype: optional MXU operand dtype (e.g. jnp.bfloat16); accumulation
                   and the bias epilogue stay f32.
    """
    *lead, K = x.shape
    M = math.prod(lead) if lead else 1
    N, K_w = weight.shape
    assert K_w == K, (K_w, K)

    out_dtype = x.dtype
    x2 = x.reshape(M, K)
    w = weight                               # keep (N, K); no wrapper transpose

    if compute_dtype is not None:
        x2 = x2.astype(compute_dtype)
        w = w.astype(compute_dtype)

    op_itemsize = jnp.dtype(x2.dtype).itemsize
    if tk is None:
        tk = 1024 if op_itemsize <= 2 else 512

    # Tile sizes: sublane dims multiple of 8, lane dims multiple of 128.
    tm = min(tm, _round_up(M, 8))
    tn = min(tn, _round_up(N, 128))
    tk = min(tk, _round_up(K, 128))
    tm, tn = _megacore_split(M, N, tm, tn)

    Mp, Np, Kp = _round_up(M, tm), _round_up(N, tn), _round_up(K, tk)

    # Pad only when needed (K zero-pad keeps the reduction correct).
    x_p = x2 if (Mp == M and Kp == K) else jnp.pad(x2, ((0, Mp - M), (0, Kp - K)))
    w_p = w if (Np == N and Kp == K) else jnp.pad(w, ((0, Np - N), (0, Kp - K)))

    has_bias = bias is not None
    out_is_acc = jnp.dtype(out_dtype) == jnp.dtype(jnp.float32)

    grid = (Mp // tm, Np // tn, Kp // tk)

    in_specs = [
        pl.BlockSpec((tm, tk), lambda i, j, k: (i, k)),   # x tile
        pl.BlockSpec((tn, tk), lambda i, j, k: (j, k)),   # W tile, native layout
    ]
    operands = [x_p, w_p]
    if has_bias:
        b = bias.astype(jnp.float32).reshape(1, N)
        b_p = b if Np == N else jnp.pad(b, ((0, 0), (0, Np - N)))
        in_specs.append(pl.BlockSpec((1, tn), lambda i, j, k: (0, j)))
        operands.append(b_p)

    scratch_shapes = [] if out_is_acc else [pltpu.VMEM((tm, tn), jnp.float32)]

    out_itemsize = jnp.dtype(out_dtype).itemsize
    cost = pl.CostEstimate(
        flops=2 * M * N * K,
        transcendentals=0,
        bytes_accessed=(M * K + N * K) * op_itemsize
                       + M * N * out_itemsize
                       + (N * 4 if has_bias else 0),
    )

    kernel = functools.partial(_linear_kernel,
                               has_bias=has_bias, out_is_acc=out_is_acc)

    out_p = pl.pallas_call(
        kernel,
        out_shape=jax.ShapeDtypeStruct((Mp, Np), out_dtype),
        grid_spec=pltpu.PrefetchScalarGridSpec(
            num_scalar_prefetch=0,
            grid=grid,
            in_specs=in_specs,
            out_specs=pl.BlockSpec((tm, tn), lambda i, j, k: (i, j)),
            scratch_shapes=scratch_shapes,
        ),
        compiler_params=pltpu.CompilerParams(
            dimension_semantics=("parallel", "parallel", "arbitrary")),
        cost_estimate=cost,
    )(*operands)

    out = out_p if (Mp == M and Np == N) else out_p[:M, :N]
    return out.reshape(*lead, N)


if __name__ == "__main__":
    key = jax.random.PRNGKey(0)
    k_x3, k_x2, k_w, k_b = jax.random.split(key, 4)

    # Small shapes consistent with the module: batch=2, seq=8, in=32, out=64.
    B, S, Din, Dout = 2, 8, 32, 64

    # xavier_uniform_ init for the weight, as in reset_params().
    bound = math.sqrt(6.0 / (Din + Dout))
    weight = jax.random.uniform(k_w, (Dout, Din), jnp.float32, -bound, bound)
    bias = 0.1 * jax.random.normal(k_b, (Dout,), dtype=jnp.float32)

    # --- 3-D input: x.matmul(W.t()) + bias branch ---------------------------
    x3 = jax.random.normal(k_x3, (B, S, Din), dtype=jnp.float32)
    out3 = jax.block_until_ready(linear_forward(x3, weight, bias))
    ref3 = x3 @ weight.T + bias
    assert out3.shape == (B, S, Dout)
    assert jnp.allclose(out3, ref3, atol=1e-4, rtol=1e-4)

    # --- 2-D input: torch.addmm branch (same math) ---------------------------
    x2 = jax.random.normal(k_x2, (B, Din), dtype=jnp.float32)
    out2 = jax.block_until_ready(linear_forward(x2, weight, bias))
    ref2 = x2 @ weight.T + bias
    assert out2.shape == (B, Dout)
    assert jnp.allclose(out2, ref2, atol=1e-4, rtol=1e-4)

    # --- bias=None + bf16 MXU operands (full-rate MXU on v5e/v6e/v7x) --------
    out_bf = jax.block_until_ready(
        linear_forward(x3, weight, None, compute_dtype=jnp.bfloat16))
    ref_nb = x3 @ weight.T
    assert out_bf.shape == (B, S, Dout)
    assert jnp.allclose(out_bf, ref_nb, atol=5e-2, rtol=5e-2)

    print("KERNEL_OK")
</pallas_src>

<mosaic_0001>
module attributes {stable_mosaic.version = 11 : i64} {
  func.func @_linear_kernel(%arg0: i32, %arg1: i32, %arg2: i32, %arg3: memref<8x128xf32, #tpu.memory_space<vmem>>, %arg4: memref<128x128xf32, #tpu.memory_space<vmem>>, %arg5: memref<1x128xf32, #tpu.memory_space<vmem>>, %arg6: memref<8x128xf32, #tpu.memory_space<vmem>>) attributes {dimension_semantics = [#tpu.dimension_semantics<parallel>, #tpu.dimension_semantics<parallel>, #tpu.dimension_semantics<arbitrary>], iteration_bounds = array<i64: 2, 1, 1>, scalar_prefetch = 0 : i64, scratch_operands = 0 : i64, tpu.core_type = #tpu.core_type<tc>, window_params = [{transform_indices = @transform_0, window_bounds = array<i64: 8, 128>}, {transform_indices = @transform_1, window_bounds = array<i64: 128, 128>}, {transform_indices = @transform_2, window_bounds = array<i64: 1, 128>}, {transform_indices = @transform_3, window_bounds = array<i64: 8, 128>}]} {
    %c0_i32 = arith.constant 0 : i32
    %0 = arith.cmpi eq, %arg2, %c0_i32 : i32
    %1 = arith.extui %0 : i1 to i32
    %c0_i32_0 = arith.constant 0 : i32
    %2 = arith.cmpi ne, %1, %c0_i32_0 : i32
    scf.if %2 {
      %cst_10 = arith.constant 0.000000e+00 : f32
      %12 = vector.broadcast %cst_10 : f32 to vector<8x128xf32>
      %c0_11 = arith.constant 0 : index
      %c0_12 = arith.constant 0 : index
      %13 = vector.load %arg6[%c0_11, %c0_12] : memref<8x128xf32, #tpu.memory_space<vmem>>, vector<8x128xf32>
      tpu.vector_store %arg6[%c0_11, %c0_12], %12 {strides = array<i32>} : memref<8x128xf32, #tpu.memory_space<vmem>>, vector<8x128xf32>,
    } else {
    }
    %c0 = arith.constant 0 : index
    %c0_1 = arith.constant 0 : index
    %3 = vector.load %arg6[%c0, %c0_1] : memref<8x128xf32, #tpu.memory_space<vmem>>, vector<8x128xf32>
    %c0_2 = arith.constant 0 : index
    %c0_3 = arith.constant 0 : index
    %4 = vector.load %arg3[%c0_2, %c0_3] : memref<8x128xf32, #tpu.memory_space<vmem>>, vector<8x128xf32>
    %c0_4 = arith.constant 0 : index
    %c0_5 = arith.constant 0 : index
    %5 = vector.load %arg4[%c0_4, %c0_5] : memref<128x128xf32, #tpu.memory_space<vmem>>, vector<128x128xf32>
    %cst = arith.constant dense<0.000000e+00> : vector<8x128xf32>
    %6 = tpu.matmul %4, %5, %cst {dimension_numbers = #tpu.dot_dimension_numbers<[1], [1], [0], [0], [0, 0, 1, 0], [], []>} : vector<8x128xf32>, vector<128x128xf32>, vector<8x128xf32> -> vector<8x128xf32>
    %7 = arith.addf %3, %6 : vector<8x128xf32>
    %c0_6 = arith.constant 0 : index
    %c0_7 = arith.constant 0 : index
    %8 = vector.load %arg6[%c0_6, %c0_7] : memref<8x128xf32, #tpu.memory_space<vmem>>, vector<8x128xf32>
    tpu.vector_store %arg6[%c0_6, %c0_7], %7 {strides = array<i32>} : memref<8x128xf32, #tpu.memory_space<vmem>>, vector<8x128xf32>,
    %c0_i32_8 = arith.constant 0 : i32
    %9 = arith.cmpi eq, %arg2, %c0_i32_8 : i32
    %10 = arith.extui %9 : i1 to i32
    %c0_i32_9 = arith.constant 0 : i32
    %11 = arith.cmpi ne, %10, %c0_i32_9 : i32
    scf.if %11 {
      %c0_10 = arith.constant 0 : index
      %c0_11 = arith.constant 0 : index
      %12 = vector.load %arg6[%c0_10, %c0_11] : memref<8x128xf32, #tpu.memory_space<vmem>>, vector<8x128xf32>
      %c0_12 = arith.constant 0 : index
      %c0_13 = arith.constant 0 : index
      %13 = vector.load %arg5[%c0_12, %c0_13] : memref<1x128xf32, #tpu.memory_space<vmem>>, vector<1x128xf32>
      %14 = vector.broadcast %13 : vector<1x128xf32> to vector<8x128xf32>
      %15 = arith.addf %12, %14 : vector<8x128xf32>
      %c0_14 = arith.constant 0 : index
      %c0_15 = arith.constant 0 : index
      %16 = vector.load %arg6[%c0_14, %c0_15] : memref<8x128xf32, #tpu.memory_space<vmem>>, vector<8x128xf32>
      tpu.vector_store %arg6[%c0_14, %c0_15], %15 {strides = array<i32>} : memref<8x128xf32, #tpu.memory_space<vmem>>, vector<8x128xf32>,
    } else {
    }
    return
  }
  func.func @transform_0(%arg0: i32, %arg1: i32, %arg2: i32) -> (i32, i32) {
    %c0_i32 = arith.constant 0 : i32
    return %arg0, %arg2 : i32, i32
  }
  func.func @transform_1(%arg0: i32, %arg1: i32, %arg2: i32) -> (i32, i32) {
    %c0_i32 = arith.constant 0 : i32
    return %arg1, %arg2 : i32, i32
  }
  func.func @transform_2(%arg0: i32, %arg1: i32, %arg2: i32) -> (i32, i32) {
    %c0_i32 = arith.constant 0 : i32
    %c0_i32_0 = arith.constant 0 : i32
    return %c0_i32, %arg1 : i32, i32
  }
  func.func @transform_3(%arg0: i32, %arg1: i32, %arg2: i32) -> (i32, i32) {
    %c0_i32 = arith.constant 0 : i32
    return %arg0, %arg1 : i32, i32
  }
}

</mosaic_0001>

<llo_original>
// kernel: tpu_custom_call.1
$region0: #{tpu_custom_call.1}
  #allocation0 [shape = 'u32[]', space=smem, size = 0x4, offset = 0x4, fixed_abs, tag = 'smem constant byte address 0x4 - core index']
  #allocation1 [shape = 'u32[144,128]{1,0:T(1,128)}', space=vmem, size = 0x12000, scoped, tag = 'internal scratch']
  %s0 = inlined_call_operand.hbm [shape: f32[16,128], index: 0, kind: input, shape index: {}]
  %s1 = inlined_call_operand.hbm [shape: f32[128,128], index: 1, kind: input, shape index: {}]
  %s2 = inlined_call_operand.vmem [shape: f32[1,128], index: 2, kind: input, shape index: {}]
  %s3 = inlined_call_operand.hbm [shape: f32[16,128], index: 3, kind: output, shape index: {}]
  %s4 = sld [smem:[#allocation0]]
  $region61: #{tpu_custom_call.1} parent=0
    _
  %s6 = ssub.s32 1, %s4
  %s7 = scalar_select 0, %s6, %s4
  $region1: #{tpu_custom_call.1} parent=0
    #allocation2 [shape = 'u8[8192]{0}', space=vmem, size = 0x2000, scoped, tag = 'input window, operand 0']
    #allocation3 [shape = 's32[2]{0}', space=sflag, size = 0x8, scoped, tag = 'scoped memory for tpu_custom_call.1']
    #allocation4 [shape = 's32[2]{0}', space=sflag, size = 0x8, scoped, tag = 'scoped memory for tpu_custom_call.1']
    #allocation5 [shape = 'u8[65536]{0}', space=vmem, size = 0x10000, scoped, tag = 'input window, operand 1, single buffered']
    #allocation6 [shape = 's32[1]{0}', space=sflag, size = 0x4, scoped, tag = 'scoped memory for tpu_custom_call.1']
    #allocation7 [shape = 'u8[8192]{0}', space=vmem, size = 0x2000, scoped, tag = 'output window, operand 0']
    %8 = vsyncpa [#allocation3], 0
    %s9 = scalar_lea.sflag [#allocation3], 1
    %10 = vsyncpa %s9, 0
    %11 = vsyncpa [#allocation6], 0
    %12 = vsyncpa [#allocation4], 0
    %s13 = scalar_lea.sflag [#allocation4], 1
    %14 = vsyncpa %s13, 0
    loop: start=0, step=1, limit=4
    $region2: #{tpu_custom_call.1} parent=1 // loop_pre_header
      _
    $region3: #{tpu_custom_call.1} parent=1 // loop_header
      %s16 = sphi 0, %s20
      %p17 = scmp.ge.s32.totalorder %s16, 4
      %s23 = sphi 0, %s42
      %s24 = sphi 0, %s38
      %s25 = sphi 0, %s34
      %s26 = sphi 0, %s23
      %s27 = sphi 0, %s24
      %s28 = sphi 0, %s25
      %s29 = sphi 0, %s26
      %s30 = sphi 0, %s27
      %s31 = sphi 0, %s28
      %s47 = sphi 0, %s49
      %s50 = sphi 0, %s47
      %s51 = sphi 0, %s50
      %s67 = sphi 0, %s51
      %s75 = sphi 0, %s77
      %s78 = sphi 0, %s75
      %s79 = sphi 0, %s78
      %s95 = sphi 0, %s79
      %s101 = sphi 0, %s103
      %s104 = sphi 0, %s101
      %s105 = sphi 0, %s104
      %s121 = sphi 0, %s105
      %s129 = sphi 0, %s131
      %s132 = sphi 0, %s129
      %s133 = sphi 0, %s132
      %s149 = sphi 0, %s133
    $region4: #{tpu_custom_call.1} parent=1 // loop_header_branch
      %19 = sbr.rel (%p17) target = $region8
    $region5: #{tpu_custom_call.1} parent=1 // loop_body
      %s21 = ssub.s32 %s16, 1
      %s22 = ssub.s32 %s16, 2
      %s32 = sadd.s32 1, %s25
      %p33 = scmp.ge.s32.totalorder %s32, 1
      %s34 = scalar_select %p33, 0, %s32
      %s35 = sadd.s32 1, %s24
      %s36 = scalar_select %p33, %s35, %s24
      %p37 = scmp.ge.s32.totalorder %s36, 1
      %s38 = scalar_select %p37, 0, %s36
      %s39 = sadd.s32 1, %s23
      %s40 = scalar_select %p37, %s39, %s23
      %p41 = scmp.ge.s32.totalorder %s40, 2
      %s42 = scalar_select %p41, 0, %s40
      %s43 = ssub.s32 %s23, %s42
      %s44 = ssub.s32 %s25, %s34
      %s45 = sor.u32 %s43, %s44
      %p46 = scmp.eq.s32.totalorder %s45, 0
      %s48 = sadd.s32 %s47, 1
      %s49 = scalar_select %p46, %s47, %s48
      %p52 = pneg %p46
      %p53 = scmp.eq.s32.totalorder %s16, 1
      %p54 = por %p52, %p53
      %p55 = scmp.ne.s32.totalorder %s47, %s50
      %p56 = scmp.eq.s32.totalorder %s16, 0
      %p57 = por %p55, %p56
      %p58 = scmp.ne.s32.totalorder %s47, %s50
      %p59 = scmp.eq.s32.totalorder %s21, 1
      %p60 = por %p58, %p59
      %p61 = scmp.ne.s32.totalorder %s50, %s51
      %p62 = scmp.eq.s32.totalorder %s21, 0
      %p63 = por %p61, %p62
      %p64 = scmp.ne.s32.totalorder %s50, %s51
      %p65 = scmp.eq.s32.totalorder %s22, 1
      %p66 = por %p64, %p65
      %p68 = scmp.ne.s32.totalorder %s51, %s67
      %p69 = scmp.eq.s32.totalorder %s22, 0
      %p70 = por %p68, %p69
      %s71 = ssub.s32 %s24, %s38
      %s72 = ssub.s32 %s25, %s34
      %s73 = sor.u32 %s71, %s72
      %p74 = scmp.eq.s32.totalorder %s73, 0
      %s76 = sadd.s32 %s75, 1
      %s77 = scalar_select %p74, %s75, %s76
      %p80 = pneg %p74
      %p81 = scmp.eq.s32.totalorder %s16, 1
      %p82 = por %p80, %p81
      %p83 = scmp.ne.s32.totalorder %s75, %s78
      %p84 = scmp.eq.s32.totalorder %s16, 0
      %p85 = por %p83, %p84
      %p86 = scmp.ne.s32.totalorder %s75, %s78
      %p87 = scmp.eq.s32.totalorder %s21, 1
      %p88 = por %p86, %p87
      %p89 = scmp.ne.s32.totalorder %s78, %s79
      %p90 = scmp.eq.s32.totalorder %s21, 0
      %p91 = por %p89, %p90
      %p92 = scmp.ne.s32.totalorder %s78, %s79
      %p93 = scmp.eq.s32.totalorder %s22, 1
      %p94 = por %p92, %p93
      %p96 = scmp.ne.s32.totalorder %s79, %s95
      %p97 = scmp.eq.s32.totalorder %s22, 0
      %p98 = por %p96, %p97
      %s99 = ssub.s32 %s24, %s38
      %p100 = scmp.eq.s32.totalorder %s99, 0
      %s102 = sadd.s32 %s101, 1
      %s103 = scalar_select %p100, %s101, %s102
      %p106 = pneg %p100
      %p107 = scmp.eq.s32.totalorder %s16, 1
      %p108 = por %p106, %p107
      %p109 = scmp.ne.s32.totalorder %s101, %s104
      %p110 = scmp.eq.s32.totalorder %s16, 0
      %p111 = por %p109, %p110
      %p112 = scmp.ne.s32.totalorder %s101, %s104
      %p113 = scmp.eq.s32.totalorder %s21, 1
      %p114 = por %p112, %p113
      %p115 = scmp.ne.s32.totalorder %s104, %s105
      %p116 = scmp.eq.s32.totalorder %s21, 0
      %p117 = por %p115, %p116
      %p118 = scmp.ne.s32.totalorder %s104, %s105
      %p119 = scmp.eq.s32.totalorder %s22, 1
      %p120 = por %p118, %p119
      %p122 = scmp.ne.s32.totalorder %s105, %s121
      %p123 = scmp.eq.s32.totalorder %s22, 0
      %p124 = por %p122, %p123
      %s125 = ssub.s32 %s23, %s42
      %s126 = ssub.s32 %s24, %s38
      %s127 = sor.u32 %s125, %s126
      %p128 = scmp.eq.s32.totalorder %s127, 0
      %s130 = sadd.s32 %s129, 1
      %s131 = scalar_select %p128, %s129, %s130
      %p134 = pneg %p128
      %p135 = scmp.eq.s32.totalorder %s16, 1
      %p136 = por %p134, %p135
      %p137 = scmp.ne.s32.totalorder %s129, %s132
      %p138 = scmp.eq.s32.totalorder %s16, 0
      %p139 = por %p137, %p138
      %p140 = scmp.ne.s32.totalorder %s129, %s132
      %p141 = scmp.eq.s32.totalorder %s21, 1
      %p142 = por %p140, %p141
      %p143 = scmp.ne.s32.totalorder %s132, %s133
      %p144 = scmp.eq.s32.totalorder %s21, 0
      %p145 = por %p143, %p144
      %p146 = scmp.ne.s32.totalorder %s132, %s133
      %p147 = scmp.eq.s32.totalorder %s22, 1
      %p148 = por %p146, %p147
      %p150 = scmp.ne.s32.totalorder %s133, %s149
      %p151 = scmp.eq.s32.totalorder %s22, 0
      %p152 = por %p150, %p151
      %p153 = scmp.le.s32.totalorder 1, %s16
      %p154 = scmp.lt.s32.totalorder %s16, 3
      %p155 = pnand %p153, %p154
      %p156 = pneg %p155
      // Predicated region
      $region9: #{tpu_custom_call.1} parent=5 // pred_check
        _
      $region10: #{tpu_custom_call.1} parent=5 // pred_check_branch
        %158 = sbr.rel (%p155) target = $region12
      $region11: #{tpu_custom_call.1} parent=5 // pred_region
        %s159 = ssub.s32 %s16, 1
        // Predicated region
        $region13: #{tpu_custom_call.1} parent=11 // pred_check
          %p160 = pneg %p91
        $region14: #{tpu_custom_call.1} parent=11 // pred_check_branch
          %162 = sbr.rel (%p160) target = $region16
        $region15: #{tpu_custom_call.1} parent=11 // pred_region
          %s163 = smul.u32 16, %s27
          %s165 = ssub.s32 2048, 2048
          %166 = vsyncadd [#allocation6], %s165
          %s167 = sadd.s32 %s28, %s163
          %s168 = smul.addr %s167, 128
          %s169 = scalar_lea.hbm %s1, %s168
          %s170 = sshll.u32 [#allocation5], 4
          %s171 = int_to_ptr.vmem [resolvable:$true] %s170
          %176 = dma.hbm_to_vmem [thread:$0]  %s169, 2048, %s171, [#allocation6], 128, 128, 8
        $region16: #{tpu_custom_call.1} parent=11 // pred_fallthru
          _
        // Predicated region
        $region17: #{tpu_custom_call.1} parent=11 // pred_check
          %p177 = pneg %p117
        $region18: #{tpu_custom_call.1} parent=11 // pred_check_branch
          %179 = sbr.rel (%p177) target = $region20
        $region19: #{tpu_custom_call.1} parent=11 // pred_region
          %p180 = scmp.lt.s32.totalorder %s27, 0
          %s181 = scalar_select %p180, %s27, 0
          %s182 = scalar_lea.vmem %s2, %s181
        $region20: #{tpu_custom_call.1} parent=11 // pred_fallthru
          _
      $region12: #{tpu_custom_call.1} parent=5 // pred_fallthru
        _
      %p183 = scmp.lt.s32.totalorder %s16, 2
      // Predicated region
      $region21: #{tpu_custom_call.1} parent=5 // pred_check
        %p184 = pneg %p183
      $region22: #{tpu_custom_call.1} parent=5 // pred_check_branch
        %186 = sbr.rel (%p184) target = $region24
      $region23: #{tpu_custom_call.1} parent=5 // pred_region
        // Predicated region
        $region25: #{tpu_custom_call.1} parent=23 // pred_check
          %p187 = pneg %p57
        $region26: #{tpu_custom_call.1} parent=23 // pred_check_branch
          %189 = sbr.rel (%p187) target = $region28
        $region27: #{tpu_custom_call.1} parent=23 // pred_region
          %s190 = sand.u32 %s47, 1
          %s191 = scalar_lea.sflag [#allocation3], %s190
          %s192 = sand.u32 %s47, 1
          %s193 = smul.addr %s192, 8
          %s194 = scalar_lea.vmem [#allocation2], %s193
          %s196 = ssub.s32 128, 128
          %197 = vsyncadd %s191, %s196
          %s198 = sadd.s32 %s25, %s23
          %s199 = smul.addr %s198, 128
          %s200 = scalar_lea.hbm %s0, %s199
          %s202 = sshll.u32 %s194, 4
          %s203 = int_to_ptr.vmem [resolvable:$true] %s202
          %205 = dma.hbm_to_vmem [thread:$0]  %s200, 128, %s203, %s191
        $region28: #{tpu_custom_call.1} parent=23 // pred_fallthru
          _
      $region24: #{tpu_custom_call.1} parent=5 // pred_fallthru
        _
      %p206 = scmp.le.s32.totalorder 1, %s16
      %p207 = scmp.lt.s32.totalorder %s16, 3
      %p208 = pnand %p206, %p207
      %p209 = pneg %p208
      // Predicated region
      $region29: #{tpu_custom_call.1} parent=5 // pred_check
        _
      $region30: #{tpu_custom_call.1} parent=5 // pred_check_branch
        %211 = sbr.rel (%p208) target = $region32
      $region31: #{tpu_custom_call.1} parent=5 // pred_region
        %s212 = ssub.s32 %s16, 1
        %s213 = sand.u32 %s50, 1
        %s214 = scalar_lea.sflag [#allocation3], %s213
        %s215 = sand.u32 %s50, 1
        %s216 = smul.addr %s215, 8
        %s217 = scalar_lea.vmem [#allocation2], %s216
        // Predicated region
        $region33: #{tpu_custom_call.1} parent=31 // pred_check
          %p218 = pneg %p63
        $region34: #{tpu_custom_call.1} parent=31 // pred_check_branch
          %220 = sbr.rel (%p218) target = $region36
        $region35: #{tpu_custom_call.1} parent=31 // pred_region
          %221 = dma.done %s214, 128
        $region36: #{tpu_custom_call.1} parent=31 // pred_fallthru
          _
        // Predicated region
        $region37: #{tpu_custom_call.1} parent=31 // pred_check
          %p222 = pneg %p91
        $region38: #{tpu_custom_call.1} parent=31 // pred_check_branch
          %224 = sbr.rel (%p222) target = $region40
        $region39: #{tpu_custom_call.1} parent=31 // pred_region
          %225 = dma.done [#allocation6], 2048
        $region40: #{tpu_custom_call.1} parent=31 // pred_fallthru
          _
        %s226 = sand.u32 %s50, 1
        %s227 = scalar_lea.sflag [#allocation3], %s226
        %s228 = sand.u32 %s50, 1
        %s229 = smul.addr %s228, 8
        %s230 = scalar_lea.vmem [#allocation2], %s229
        %p231 = pneg %p63
        %p232 = pneg %p60
        %p233 = pneg %p91
        %p234 = pneg %p88
        %p235 = scmp.lt.s32.totalorder %s27, 0
        %s236 = scalar_select %p235, %s27, 0
        %s237 = scalar_lea.vmem %s2, %s236
        %p238 = pneg %p117
        %p239 = pneg %p114
        %p240 = pneg %p145
        %p241 = pneg %p142
        %s242 = sand.u32 %s132, 1
        %s243 = scalar_lea.sflag [#allocation4], %s242
        %s244 = sand.u32 %s132, 1
        %s245 = smul.addr %s244, 8
        %s246 = scalar_lea.vmem [#allocation7], %s245
        %s247 = smul.u32 16, %s27
        %p248 = scmp.lt.s32.totalorder %s27, 0
        %s249 = scalar_select %p248, %s27, 0
        %s250 = scalar_lea.vmem %s2, %s249
        %p251 = scmp.eq.s32.totalorder %s28, 0
        // Predicated region
        $region41: #{tpu_custom_call.1} parent=31 // pred_check
          %p252 = pneg %p251
        $region42: #{tpu_custom_call.1} parent=31 // pred_check_branch
          %254 = sbr.rel (%p252) target = $region44
        $region43: #{tpu_custom_call.1} parent=31 // pred_region
          %255 = vst [vmem:[%s246] sm:$0xff] 0.0
        $region44: #{tpu_custom_call.1} parent=31 // pred_fallthru
          _
        %v256 = vld [vmem:[%s246] sm:$0xff]
        %v257 = vld [vmem:[%s217] sm:$0xff]
        %v258 = vld [vmem:[#allocation5] sm:$0xff]
        %v259 = vld [vmem:[#allocation5 + $0x8] sm:$0xff]
        %v260 = vld [vmem:[#allocation5 + $0x10] sm:$0xff]
        %v261 = vld [vmem:[#allocation5 + $0x18] sm:$0xff]
        %v262 = vld [vmem:[#allocation5 + $0x20] sm:$0xff]
        %v263 = vld [vmem:[#allocation5 + $0x28] sm:$0xff]
        %v264 = vld [vmem:[#allocation5 + $0x30] sm:$0xff]
        %v265 = vld [vmem:[#allocation5 + $0x38] sm:$0xff]
        %v266 = vld [vmem:[#allocation5 + $0x40] sm:$0xff]
        %v267 = vld [vmem:[#allocation5 + $0x48] sm:$0xff]
        %v268 = vld [vmem:[#allocation5 + $0x50] sm:$0xff]
        %v269 = vld [vmem:[#allocation5 + $0x58] sm:$0xff]
        %v270 = vld [vmem:[#allocation5 + $0x60] sm:$0xff]
        %v271 = vld [vmem:[#allocation5 + $0x68] sm:$0xff]
        %v272 = vld [vmem:[#allocation5 + $0x70] sm:$0xff]
        %v273 = vld [vmem:[#allocation5 + $0x78] sm:$0xff]
        %274 = vmatprep.subr.mxu0 0.0
        %275 = vmatpush1.xpose.msra.mxu0 %v258
        %276 = vmatprep.subr.mxu0 0.0
        %277 = vmatpush1.xpose.msra.mxu0 %v259
        %278 = vmatprep.subr.mxu0 0.0
        %279 = vmatpush1.xpose.msra.mxu0 %v260
        %280 = vmatprep.subr.mxu0 0.0
        %281 = vmatpush1.xpose.msra.mxu0 %v261
        %282 = vmatprep.subr.mxu0 0.0
        %283 = vmatpush1.xpose.msra.mxu0 %v262
        %284 = vmatprep.subr.mxu0 0.0
        %285 = vmatpush1.xpose.msra.mxu0 %v263
        %286 = vmatprep.subr.mxu0 0.0
        %287 = vmatpush1.xpose.msra.mxu0 %v264
        %288 = vmatprep.subr.mxu0 0.0
        %289 = vmatpush1.xpose.msra.mxu0 %v265
        %290 = vmatprep.subr.mxu0 0.0
        %291 = vmatpush1.xpose.msra.mxu0 %v266
        %292 = vmatprep.subr.mxu0 0.0
        %293 = vmatpush1.xpose.msra.mxu0 %v267
        %294 = vmatprep.subr.mxu0 0.0
        %295 = vmatpush1.xpose.msra.mxu0 %v268
        %296 = vmatprep.subr.mxu0 0.0
        %297 = vmatpush1.xpose.msra.mxu0 %v269
        %298 = vmatprep.subr.mxu0 0.0
        %299 = vmatpush1.xpose.msra.mxu0 %v270
        %300 = vmatprep.subr.mxu0 0.0
        %301 = vmatpush1.xpose.msra.mxu0 %v271
        %302 = vmatprep.subr.mxu0 0.0
        %303 = vmatpush1.xpose.msra.mxu0 %v272
        %304 = vmatprep.subr.mxu0 0.0
        %305 = vmatpush1.xpose.msra.mxu0 %v273
        %306 = vmatprep.subr.mxu0 0.0
        %307 = vmatpush1.xpose.msra.mxu0 0.0
        %308 = vmatprep.subr.mxu0 0.0
        %309 = vmatpush1.xpose.msra.mxu0 0.0
        %310 = vmatprep.subr.mxu0 0.0
        %311 = vmatpush1.xpose.msra.mxu0 0.0
        %312 = vmatprep.subr.mxu0 0.0
        %313 = vmatpush1.xpose.msra.mxu0 0.0
        %314 = vmatprep.subr.mxu0 0.0
        %315 = vmatpush1.xpose.msra.mxu0 0.0
        %316 = vmatprep.subr.mxu0 0.0
        %317 = vmatpush1.xpose.msra.mxu0 0.0
        %318 = vmatprep.subr.mxu0 0.0
        %319 = vmatpush1.xpose.msra.mxu0 0.0
        %320 = vmatprep.subr.mxu0 0.0
        %321 = vmatpush1.xpose.msra.mxu0 0.0
        %322 = vmatprep.subr.mxu0 0.0
        %323 = vmatpush1.xpose.msra.mxu0 0.0
        %324 = vmatprep.subr.mxu0 0.0
        %325 = vmatpush1.xpose.msra.mxu0 0.0
        %326 = vmatprep.subr.mxu0 0.0
        %327 = vmatpush1.xpose.msra.mxu0 0.0
        %328 = vmatprep.subr.mxu0 0.0
        %329 = vmatpush1.xpose.msra.mxu0 0.0
        %330 = vmatprep.subr.mxu0 0.0
        %331 = vmatpush1.xpose.msra.mxu0 0.0
        %332 = vmatprep.subr.mxu0 0.0
        %333 = vmatpush1.xpose.msra.mxu0 0.0
        %334 = vmatprep.subr.mxu0 0.0
        %335 = vmatpush1.xpose.msra.mxu0 0.0
        %336 = vmatprep.subr.mxu0 0.0
        %337 = vmatpush1.xpose.msra.mxu0 0.0
        %338 = vmatprep.mubr.f32.mxu0 0.0
        %339 = vmatmul.mubr.f32.gmra.mrb[0].mxu0 %v257
        %v340 = vpop.f32.mrb[0].mxu0
        %v341 = vadd.f32 0.0, %v340
        %v342 = vpop.f32.mrb[0].mxu0
        %343 = vdwg.mxu0
        %v344 = vadd.f32 %v256, %v341
        %345 = vst [vmem:[%s246] sm:$0xff] %v344
        // Predicated region
        $region45: #{tpu_custom_call.1} parent=31 // pred_check
          %p346 = pneg %p251
        $region46: #{tpu_custom_call.1} parent=31 // pred_check_branch
          %348 = sbr.rel (%p346) target = $region48
        $region47: #{tpu_custom_call.1} parent=31 // pred_region
          %v349 = vld [vmem:[%s246] sm:$0xff]
          %v350 = vld [vmem:[%s250] sm:$0x1]
          %v352 = vlaneseq
          %v353 = vshrl.u32 %v352, 7
          %v354 = vsub.s32 0, %v353
          %v355 = vrot.slane %v350, %v354
          %v357 = vadd.f32 %v349, %v355
          %358 = vst [vmem:[%s246] sm:$0xff] %v357
        $region48: #{tpu_custom_call.1} parent=31 // pred_fallthru
          _
        %s359 = sand.u32 %s132, 1
        %s360 = scalar_lea.sflag [#allocation4], %s359
        %s361 = sand.u32 %s132, 1
        %s362 = smul.addr %s361, 8
        %s363 = scalar_lea.vmem [#allocation7], %s362
        // Predicated region
        $region49: #{tpu_custom_call.1} parent=31 // pred_check
          %p364 = pneg %p142
        $region50: #{tpu_custom_call.1} parent=31 // pred_check_branch
          %366 = sbr.rel (%p364) target = $region52
        $region51: #{tpu_custom_call.1} parent=31 // pred_region
          %s368 = ssub.s32 128, 128
          %369 = vsyncadd %s360, %s368
          %s370 = sadd.s32 %s27, %s26
          %s371 = smul.addr %s370, 128
          %s372 = scalar_lea.hbm %s3, %s371
          %s374 = sshll.u32 %s363, 4
          %s375 = int_to_ptr.vmem [resolvable:$true] %s374
          %377 = dma.vmem_to_hbm [thread:$0]  %s375, 128, %s372, %s360
        $region52: #{tpu_custom_call.1} parent=31 // pred_fallthru
          _
      $region32: #{tpu_custom_call.1} parent=5 // pred_fallthru
        _
      %p378 = scmp.le.s32.totalorder 2, %s16
      // Predicated region
      $region53: #{tpu_custom_call.1} parent=5 // pred_check
        %p379 = pneg %p378
      $region54: #{tpu_custom_call.1} parent=5 // pred_check_branch
        %381 = sbr.rel (%p379) target = $region56
      $region55: #{tpu_custom_call.1} parent=5 // pred_region
        %s382 = ssub.s32 %s16, 2
        // Predicated region
        $region57: #{tpu_custom_call.1} parent=55 // pred_check
          %p383 = pneg %p148
        $region58: #{tpu_custom_call.1} parent=55 // pred_check_branch
          %385 = sbr.rel (%p383) target = $region60
        $region59: #{tpu_custom_call.1} parent=55 // pred_region
          %s386 = sand.u32 %s133, 1
          %s387 = scalar_lea.sflag [#allocation4], %s386
          %s388 = sand.u32 %s133, 1
          %s389 = smul.addr %s388, 8
          %s390 = scalar_lea.vmem [#allocation7], %s389
          %391 = dma.done %s387, 128
        $region60: #{tpu_custom_call.1} parent=55 // pred_fallthru
          _
      $region56: #{tpu_custom_call.1} parent=5 // pred_fallthru
        _
    $region6: #{tpu_custom_call.1} parent=1 // loop_footer
      %s20 = sadd.s32 1, %s16
    $region7: #{tpu_custom_call.1} parent=1 // loop_footer_branch
      %15 = sbr.rel target = $region3
    $region8: #{tpu_custom_call.1} parent=1 // loop_exit
      _
    %392 = vsyncpa [#allocation3], 1
    %s393 = scalar_lea.sflag [#allocation3], 1
    %394 = vsyncpa %s393, 1
    %395 = vsyncpa [#allocation6], 1
    %396 = vsyncpa [#allocation4], 1
    %s397 = scalar_lea.sflag [#allocation4], 1
    %398 = vsyncpa %s397, 1

</llo_original>
